<compile_context>
chip_gen: v5e
topology: v5e:2x2
jax: 0.10.0
libtpu: 0.0.40
codegen_flags: <defaults>
</compile_context>

<pallas_src>
import functools

import jax
import jax.numpy as jnp
from jax.experimental import pallas as pl
from jax.experimental.pallas import tpu as pltpu

LANES = 128                     # vreg lane width
SUBLANES = 8                    # vreg sublane count (f32)
TILE_BYTE_BUDGET = 4 * 1024 * 1024   # bytes per input block (x2 inputs x2 buffers)
VMEM_LIMIT_BYTES = 48 << 20     # under v7x's 64 MiB physical VMEM


def _round_up(x, m):
    return ((x + m - 1) // m) * m


def _is_v7x():
    try:
        kind = jax.devices()[0].device_kind
    except Exception:
        return False
    return "v7" in kind.lower()


def _l1_sum_kernel(out_ref, tgt_ref, sum_ref, acc_ref, *,
                   rows, tile_rows, steps, may_need_mask):
    """Accumulate sum(|out - tgt|) into a per-partition (1,1,1) output."""
    p = pl.program_id(0)   # partition (CORE_PARALLEL on v7x, trivial elsewhere)
    i = pl.program_id(1)   # reduction step within the partition

    @pl.when(i == 0)
    def _():
        acc_ref[...] = jnp.zeros_like(acc_ref)

    # abs-diff in native dtype (matches PyTorch), upcast once for accumulation.
    diff = jnp.abs(out_ref[...] - tgt_ref[...]).astype(jnp.float32)

    groups = tile_rows // SUBLANES

    def partial_sum(d):
        # (tile_rows, 128) -> (groups, 8, 128); sum over the leading axis is a
        # tree of per-vreg VPU adds (no XLU), producing one (8, 128) vreg.
        return jnp.sum(d.reshape(groups, SUBLANES, LANES), axis=0)

    if may_need_mask:
        start_row = (p * steps + i) * tile_rows
        needs_mask = start_row + tile_rows > rows

        @pl.when(jnp.logical_not(needs_mask))
        def _():
            acc_ref[...] += partial_sum(diff)

        @pl.when(needs_mask)
        def _():
            # where-select (not multiply-by-mask) so out-of-range VMEM garbage
            # (possibly NaN/Inf) contributes exactly zero.
            row_ids = jax.lax.broadcasted_iota(jnp.int32, diff.shape, 0)
            masked = jnp.where(row_ids < (rows - start_row), diff, 0.0)
            acc_ref[...] += partial_sum(masked)
    else:
        acc_ref[...] += partial_sum(diff)

    # Single cross-lane/sublane reduce per partition, on the last step.
    @pl.when(i == steps - 1)
    def _():
        sum_ref[...] = jnp.zeros_like(sum_ref) + jnp.sum(acc_ref[...])


def l1_loss(output, target, weight=1.0, average_factor=1.0, loss_weight=1.0):
    # TODO(synk): only scalar `weight` is supported (the PyTorch default);
    # a broadcastable weight tensor would need an extra tiled input.
    assert output.shape == target.shape

    out_flat = output.reshape(-1)
    tgt_flat = target.reshape(-1)
    n = out_flat.size

    rows = n // LANES
    n_main = rows * LANES

    total = jnp.float32(0.0)

    if rows > 0:
        if n_main != n:
            # TODO(synk): this prefix slice costs one extra HBM pass for ragged
            # sizes; a flat 1-D-block kernel with element-index masking would
            # remove it.  (Not hit for sizes divisible by 128.)
            out_main = out_flat[:n_main]
            tgt_main = tgt_flat[:n_main]
        else:
            out_main, tgt_main = out_flat, tgt_flat

        out2 = out_main.reshape(rows, LANES)
        tgt2 = tgt_main.reshape(rows, LANES)

        itemsize = jnp.dtype(output.dtype).itemsize
        # Sublane packing granule: 8 for f32, 16 for bf16/f16, 32 for int8.
        granule = SUBLANES * max(1, 4 // max(1, itemsize))

        # Byte-budgeted tile: ~TILE_BYTE_BUDGET bytes per input block, so all
        # dtypes stream equally large blocks and per-step overhead stays small.
        budget_rows = (TILE_BYTE_BUDGET // (LANES * itemsize)) // granule * granule
        budget_rows = max(granule, budget_rows)

        if rows <= budget_rows:
            # Single block; keep it a multiple of the sublane granule (excess
            # rows, if any, are masked in-kernel).
            tile_rows = rows if rows % granule == 0 else _round_up(rows, granule)
        else:
            tile_rows = budget_rows

        num_blocks = (rows + tile_rows - 1) // tile_rows

        on_v7x = _is_v7x()
        num_parts = 2 if (on_v7x and num_blocks >= 2) else 1
        steps = (num_blocks + num_parts - 1) // num_parts

        # Static: does any block extend past `rows` (partial last block, block
        # rounded above rows, or clamped duplicate block on the 2-core split)?
        may_need_mask = (tile_rows * num_parts * steps) != rows

        if num_parts == 2:
            semantics = (pltpu.CORE_PARALLEL, pltpu.ARBITRARY)
        else:
            semantics = ("arbitrary", "arbitrary")

        def in_map(p, i):
            blk = p * steps + i
            # Clamp so no block index falls outside the array; duplicated
            # blocks are fully masked inside the kernel.
            return (jnp.minimum(blk, num_blocks - 1), 0)

        kernel = functools.partial(
            _l1_sum_kernel, rows=rows, tile_rows=tile_rows, steps=steps,
            may_need_mask=may_need_mask)

        partials = pl.pallas_call(
            kernel,
            out_shape=jax.ShapeDtypeStruct((num_parts, 1, 1), jnp.float32),
            grid=(num_parts, steps),
            in_specs=[
                pl.BlockSpec((tile_rows, LANES), in_map),   # output tile
                pl.BlockSpec((tile_rows, LANES), in_map),   # target tile
            ],
            out_specs=pl.BlockSpec((1, 1, 1), lambda p, i: (p, 0, 0)),
            scratch_shapes=[pltpu.VMEM((SUBLANES, LANES), jnp.float32)],
            compiler_params=pltpu.CompilerParams(
                dimension_semantics=semantics,
                vmem_limit_bytes=VMEM_LIMIT_BYTES),
            cost_estimate=pl.CostEstimate(
                flops=3 * n_main,
                transcendentals=0,
                bytes_accessed=2 * n_main * itemsize + 4 * num_parts),
        )(out2, tgt2)

        total = jnp.sum(partials)

    # Tail of < 128 elements: reduce in plain JAX (cheaper than padding the
    # whole arrays through HBM just for a sub-vreg remainder).
    if n_main != n:
        tail = jnp.abs(out_flat[n_main:].astype(jnp.float32)
                       - tgt_flat[n_main:].astype(jnp.float32))
        total = total + jnp.sum(tail)

    eps = float(jnp.finfo(jnp.float32).eps)  # matches torch.finfo(torch.float32).eps
    # Scalar weight hoisted out of the kernel: sum(|d| * w) == w * sum(|d|).
    return loss_weight * weight * total / (average_factor + eps)


if __name__ == "__main__":
    key = jax.random.PRNGKey(0)
    k1, k2 = jax.random.split(key)
    # small NCHW inputs, consistent with a typical conv-head output
    output = jax.random.normal(k1, (2, 4, 16, 16), dtype=jnp.float32)
    target = jax.random.normal(k2, (2, 4, 16, 16), dtype=jnp.float32)

    loss_weight = 1.0
    weight = 1.0
    average_factor = 2.0

    loss = l1_loss(output, target, weight=weight,
                   average_factor=average_factor, loss_weight=loss_weight)
    jax.block_until_ready(loss)

    # pure-JAX reference check
    eps = float(jnp.finfo(jnp.float32).eps)
    ref = loss_weight * jnp.sum(jnp.abs(output - target) * weight) / (average_factor + eps)
    assert jnp.allclose(loss, ref, rtol=1e-5, atol=1e-5), (loss, ref)

    print("KERNEL_OK")
</pallas_src>

<mosaic_0001>
module attributes {stable_mosaic.version = 11 : i64} {
  func.func @_l1_sum_kernel(%arg0: i32, %arg1: i32, %arg2: memref<16x128xf32, #tpu.memory_space<vmem>>, %arg3: memref<16x128xf32, #tpu.memory_space<vmem>>, %arg4: memref<1x1x1xf32, #tpu.memory_space<vmem>>, %arg5: memref<8x128xf32, #tpu.memory_space<vmem>>) attributes {dimension_semantics = [#tpu.dimension_semantics<arbitrary>, #tpu.dimension_semantics<arbitrary>], iteration_bounds = array<i64: 1, 1>, scalar_prefetch = 0 : i64, scratch_operands = 1 : i64, tpu.core_type = #tpu.core_type<tc>, window_params = [{transform_indices = @transform_0, window_bounds = array<i64: 16, 128>}, {transform_indices = @transform_1, window_bounds = array<i64: 16, 128>}, {transform_indices = @transform_2, window_bounds = array<i64: 1, 1, 1>}]} {
    %c0_i32 = arith.constant 0 : i32
    %0 = arith.cmpi eq, %arg1, %c0_i32 : i32
    %1 = arith.extui %0 : i1 to i32
    %c0_i32_0 = arith.constant 0 : i32
    %2 = arith.cmpi ne, %1, %c0_i32_0 : i32
    scf.if %2 {
      %cst_10 = arith.constant 0.000000e+00 : f32
      %15 = vector.broadcast %cst_10 : f32 to vector<8x128xf32>
      %c0_11 = arith.constant 0 : index
      %c0_12 = arith.constant 0 : index
      %16 = vector.load %arg5[%c0_11, %c0_12] : memref<8x128xf32, #tpu.memory_space<vmem>>, vector<8x128xf32>
      tpu.vector_store %arg5[%c0_11, %c0_12], %15 {strides = array<i32>} : memref<8x128xf32, #tpu.memory_space<vmem>>, vector<8x128xf32>,
    } else {
    }
    %c0 = arith.constant 0 : index
    %c0_1 = arith.constant 0 : index
    %3 = vector.load %arg2[%c0, %c0_1] : memref<16x128xf32, #tpu.memory_space<vmem>>, vector<16x128xf32>
    %c0_2 = arith.constant 0 : index
    %c0_3 = arith.constant 0 : index
    %4 = vector.load %arg3[%c0_2, %c0_3] : memref<16x128xf32, #tpu.memory_space<vmem>>, vector<16x128xf32>
    %5 = arith.subf %3, %4 : vector<16x128xf32>
    %6 = math.absf %5 : vector<16x128xf32>
    %c0_4 = arith.constant 0 : index
    %c0_5 = arith.constant 0 : index
    %7 = vector.load %arg5[%c0_4, %c0_5] : memref<8x128xf32, #tpu.memory_space<vmem>>, vector<8x128xf32>
    %8 = vector.shape_cast %6 : vector<16x128xf32> to vector<2x8x128xf32>
    %cst = arith.constant dense<0.000000e+00> : vector<8x128xf32>
    %9 = vector.multi_reduction <add>, %8, %cst [0] : vector<2x8x128xf32> to vector<8x128xf32>
    %10 = arith.addf %7, %9 : vector<8x128xf32>
    %c0_6 = arith.constant 0 : index
    %c0_7 = arith.constant 0 : index
    %11 = vector.load %arg5[%c0_6, %c0_7] : memref<8x128xf32, #tpu.memory_space<vmem>>, vector<8x128xf32>
    tpu.vector_store %arg5[%c0_6, %c0_7], %10 {strides = array<i32>} : memref<8x128xf32, #tpu.memory_space<vmem>>, vector<8x128xf32>,
    %c0_i32_8 = arith.constant 0 : i32
    %12 = arith.cmpi eq, %arg1, %c0_i32_8 : i32
    %13 = arith.extui %12 : i1 to i32
    %c0_i32_9 = arith.constant 0 : i32
    %14 = arith.cmpi ne, %13, %c0_i32_9 : i32
    scf.if %14 {
      %cst_10 = arith.constant 0.000000e+00 : f32
      %15 = vector.broadcast %cst_10 : f32 to vector<1x1x1xf32>
      %c0_11 = arith.constant 0 : index
      %c0_12 = arith.constant 0 : index
      %16 = vector.load %arg5[%c0_11, %c0_12] : memref<8x128xf32, #tpu.memory_space<vmem>>, vector<8x128xf32>
      %17 = vector.shape_cast %16 : vector<8x128xf32> to vector<1x8x128xf32>
      %cst_13 = arith.constant dense<0.000000e+00> : vector<1xf32>
      %18 = vector.multi_reduction <add>, %17, %cst_13 [1, 2] : vector<1x8x128xf32> to vector<1xf32>
      %19 = vector.shape_cast %18 : vector<1xf32> to vector<1x1x1xf32>
      %20 = vector.extract %19[0, 0, 0] : f32 from vector<1x1x1xf32>
      %21 = vector.broadcast %20 : f32 to vector<1x1x1xf32>
      %22 = arith.addf %15, %21 : vector<1x1x1xf32>
      %c0_14 = arith.constant 0 : index
      %c0_15 = arith.constant 0 : index
      %c0_16 = arith.constant 0 : index
      %23 = vector.load %arg4[%c0_14, %c0_15, %c0_16] : memref<1x1x1xf32, #tpu.memory_space<vmem>>, vector<1x1x1xf32>
      tpu.vector_store %arg4[%c0_14, %c0_15, %c0_16], %22 {strides = array<i32>} : memref<1x1x1xf32, #tpu.memory_space<vmem>>, vector<1x1x1xf32>,
    } else {
    }
    return
  }
  func.func @transform_0(%arg0: i32, %arg1: i32) -> (i32, i32) {
    %c1_i32 = arith.constant 1 : i32
    %0 = arith.muli %arg0, %c1_i32 : i32
    %1 = arith.addi %0, %arg1 : i32
    %c0_i32 = arith.constant 0 : i32
    %2 = arith.minsi %1, %c0_i32 : i32
    %c0_i32_0 = arith.constant 0 : i32
    %c0_i32_1 = arith.constant 0 : i32
    return %2, %c0_i32_0 : i32, i32
  }
  func.func @transform_1(%arg0: i32, %arg1: i32) -> (i32, i32) {
    %c1_i32 = arith.constant 1 : i32
    %0 = arith.muli %arg0, %c1_i32 : i32
    %1 = arith.addi %0, %arg1 : i32
    %c0_i32 = arith.constant 0 : i32
    %2 = arith.minsi %1, %c0_i32 : i32
    %c0_i32_0 = arith.constant 0 : i32
    %c0_i32_1 = arith.constant 0 : i32
    return %2, %c0_i32_0 : i32, i32
  }
  func.func @transform_2(%arg0: i32, %arg1: i32) -> (i32, i32, i32) {
    %c0_i32 = arith.constant 0 : i32
    %c0_i32_0 = arith.constant 0 : i32
    %c0_i32_1 = arith.constant 0 : i32
    return %arg0, %c0_i32, %c0_i32_0 : i32, i32, i32
  }
}

</mosaic_0001>

<llo_original>
// kernel: tpu_custom_call.1
$region0: #{tpu_custom_call.1}
  #allocation0 [shape = 'u32[]', space=smem, size = 0x4, offset = 0x4, fixed_abs, tag = 'smem constant byte address 0x4 - core index']
  #allocation1 [shape = 'u32[72,128]{1,0:T(1,128)}', space=vmem, size = 0x9000, scoped, tag = 'internal scratch']
  #allocation2 [shape = 'f32[8,128]{1,0:T(8,128)}', space=vmem, size = 0x1000, scoped, tag = 'scratch operand']
  %s0 = inlined_call_operand.hbm [shape: f32[16,128], index: 0, kind: input, shape index: {}]
  %s1 = inlined_call_operand.hbm [shape: f32[16,128], index: 1, kind: input, shape index: {}]
  %s2 = inlined_call_operand.hbm [shape: f32[1,1,1], index: 2, kind: output, shape index: {}]
  %s3 = sld [smem:[#allocation0]]
  $region34: #{tpu_custom_call.1} parent=0
    _
  %s5 = ssub.s32 1, %s3
  %s6 = scalar_select 0, %s5, %s3
  $region1: #{tpu_custom_call.1} parent=0
    #allocation3 [shape = 'u8[8192]{0}', space=vmem, size = 0x2000, scoped, tag = 'input window, operand 0, single buffered']
    #allocation4 [shape = 's32[1]{0}', space=sflag, size = 0x4, scoped, tag = 'scoped memory for tpu_custom_call.1']
    #allocation5 [shape = 's32[1]{0}', space=sflag, size = 0x4, scoped, tag = 'scoped memory for tpu_custom_call.1']
    #allocation6 [shape = 'u8[8192]{0}', space=vmem, size = 0x2000, scoped, tag = 'input window, operand 1, single buffered']
    #allocation7 [shape = 's32[1]{0}', space=sflag, size = 0x4, scoped, tag = 'scoped memory for tpu_custom_call.1']
    #allocation8 [shape = 'u8[512]{0}', space=vmem, size = 0x400, scoped, tag = 'output window, operand 0, single buffered']
    %7 = vsyncpa [#allocation4], 0
    %8 = vsyncpa [#allocation7], 0
    %9 = vsyncpa [#allocation5], 0
    // Predicated region
    $region2: #{tpu_custom_call.1} parent=1 // pred_check
      _
    $region3: #{tpu_custom_call.1} parent=1 // pred_check_branch
      %11 = sbr.rel (0) target = $region5
    $region4: #{tpu_custom_call.1} parent=1 // pred_region
      %s12 = sadd.s32 0, 0
      %p13 = scmp.lt.s32.totalorder %s12, 0
      %s14 = scalar_select %p13, %s12, 0
      %s15 = smul.u32 2, %s14
      %17 = vsyncadd [#allocation4], 0
      %s18 = smul.addr %s15, 8
      %s19 = scalar_lea.hbm %s0, %s18
      %s20 = sshll.u32 %s19, 4
      %s21 = int_to_ptr.hbm [resolvable:$true] %s20
      %s22 = sshll.u32 [#allocation3], 4
      %s23 = int_to_ptr.vmem [resolvable:$true] %s22
      %28 = dma.hbm_to_vmem [thread:$0]  %s21, 256, %s23, [#allocation4], 128, 128, 8
    $region5: #{tpu_custom_call.1} parent=1 // pred_fallthru
      _
    // Predicated region
    $region6: #{tpu_custom_call.1} parent=1 // pred_check
      _
    $region7: #{tpu_custom_call.1} parent=1 // pred_check_branch
      %30 = sbr.rel (0) target = $region9
    $region8: #{tpu_custom_call.1} parent=1 // pred_region
      %s31 = sadd.s32 0, 0
      %p32 = scmp.lt.s32.totalorder %s31, 0
      %s33 = scalar_select %p32, %s31, 0
      %s34 = smul.u32 2, %s33
      %36 = vsyncadd [#allocation7], 0
      %s37 = smul.addr %s34, 8
      %s38 = scalar_lea.hbm %s1, %s37
      %s39 = sshll.u32 %s38, 4
      %s40 = int_to_ptr.hbm [resolvable:$true] %s39
      %s41 = sshll.u32 [#allocation6], 4
      %s42 = int_to_ptr.vmem [resolvable:$true] %s41
      %47 = dma.hbm_to_vmem [thread:$0]  %s40, 256, %s42, [#allocation7], 128, 128, 8
    $region9: #{tpu_custom_call.1} parent=1 // pred_fallthru
      _
    // Predicated region
    $region10: #{tpu_custom_call.1} parent=1 // pred_check
      _
    $region11: #{tpu_custom_call.1} parent=1 // pred_check_branch
      %49 = sbr.rel (0) target = $region13
    $region12: #{tpu_custom_call.1} parent=1 // pred_region
      %51 = dma.done [#allocation4], 256
    $region13: #{tpu_custom_call.1} parent=1 // pred_fallthru
      _
    // Predicated region
    $region14: #{tpu_custom_call.1} parent=1 // pred_check
      _
    $region15: #{tpu_custom_call.1} parent=1 // pred_check_branch
      %53 = sbr.rel (0) target = $region17
    $region16: #{tpu_custom_call.1} parent=1 // pred_region
      %55 = dma.done [#allocation7], 256
    $region17: #{tpu_custom_call.1} parent=1 // pred_fallthru
      _
    %s56 = sadd.s32 0, 0
    %p57 = scmp.lt.s32.totalorder %s56, 0
    %s58 = scalar_select %p57, %s56, 0
    %s59 = smul.u32 2, %s58
    %s60 = sadd.s32 0, 0
    %p61 = scmp.lt.s32.totalorder %s60, 0
    %s62 = scalar_select %p61, %s60, 0
    %s63 = smul.u32 2, %s62
    %p64 = scmp.eq.s32.totalorder 0, 0
    // Predicated region
    $region18: #{tpu_custom_call.1} parent=1 // pred_check
      %p65 = pneg %p64
    $region19: #{tpu_custom_call.1} parent=1 // pred_check_branch
      %67 = sbr.rel (%p65) target = $region21
    $region20: #{tpu_custom_call.1} parent=1 // pred_region
      %68 = vst [vmem:[#allocation2] sm:$0xff] 0.0
    $region21: #{tpu_custom_call.1} parent=1 // pred_fallthru
      _
    %v69 = vld [vmem:[#allocation3] sm:$0xff]
    %v70 = vld [vmem:[#allocation3 + $0x8] sm:$0xff]
    %v71 = vld [vmem:[#allocation6] sm:$0xff]
    %v72 = vld [vmem:[#allocation6 + $0x8] sm:$0xff]
    %v73 = vsub.f32 %v69, %v71
    %v74 = vsub.f32 %v70, %v72
    %v75 = vand.u32 2147483647, %v73
    %v76 = vand.u32 2147483647, %v74
    %v77 = vld [vmem:[#allocation2] sm:$0xff]
    %v78 = vadd.f32 %v75, %v76
    %v79 = vadd.f32 %v77, %v78
    %80 = vst [vmem:[#allocation2] sm:$0xff] %v79
    // Predicated region
    $region22: #{tpu_custom_call.1} parent=1 // pred_check
      %p81 = pneg %p64
    $region23: #{tpu_custom_call.1} parent=1 // pred_check_branch
      %83 = sbr.rel (%p81) target = $region25
    $region24: #{tpu_custom_call.1} parent=1 // pred_region
      %v84 = vld [vmem:[#allocation2] sm:$0xff]
      %85 = vadd.xlane.f32.xlu0 %v84
      %v86 = vpop.xlane.xlu0 %85
      %v87 = vrot.slane %v86, 4
      %v88 = vadd.f32 %v86, %v87
      %v89 = vrot.slane %v88, 2
      %v90 = vadd.f32 %v88, %v89
      %v91 = vrot.slane %v90, 1
      %v92 = vadd.f32 %v90, %v91
      %s93 = vtos %v92
      %v94 = vstv %s93
      %v95 = vadd.f32 %v94, 0.0
      %vm96 = vcmask 0
      %97 = vst.msk [vmem:[#allocation8] sm:$0x1] %vm96, %v95
    $region25: #{tpu_custom_call.1} parent=1 // pred_fallthru
      _
    // Predicated region
    $region26: #{tpu_custom_call.1} parent=1 // pred_check
      _
    $region27: #{tpu_custom_call.1} parent=1 // pred_check_branch
      %99 = sbr.rel (0) target = $region29
    $region28: #{tpu_custom_call.1} parent=1 // pred_region
      %101 = vsyncadd [#allocation5], 0
      %s103 = sshll.u32 [#allocation8], 4
      %s104 = int_to_ptr.vmem [resolvable:$true] %s103
      %s105 = sshll.u32 %s2, 4
      %s106 = int_to_ptr.hbm [resolvable:$true] %s105
      %108 = dma.vmem_to_hbm [thread:$0]  %s104, 16, %s106, [#allocation5]
    $region29: #{tpu_custom_call.1} parent=1 // pred_fallthru
      _
    // Predicated region
    $region30: #{tpu_custom_call.1} parent=1 // pred_check
      _
    $region31: #{tpu_custom_call.1} parent=1 // pred_check_branch
      %110 = sbr.rel (0) target = $region33
    $region32: #{tpu_custom_call.1} parent=1 // pred_region
      %112 = dma.done [#allocation5], 16
    $region33: #{tpu_custom_call.1} parent=1 // pred_fallthru
      _
    %113 = vsyncpa [#allocation4], 1
    %114 = vsyncpa [#allocation7], 1
    %115 = vsyncpa [#allocation5], 1

</llo_original>
